<compile_context>
chip_gen: v7x
topology: tpu7x:2x2x1
jax: 0.10.0
libtpu: 0.0.40
codegen_flags: <defaults>
</compile_context>

<pallas_src>
import math
from functools import partial

import jax
import jax.numpy as jnp
from jax.experimental import pallas as pl
from jax.experimental.pallas import tpu as pltpu


_SQRT_HALF = 0.7071067811865476  # 1/sqrt(2)


def _erf_f32(x):
    """Abramowitz & Stegun 7.1.26 rational approximation of erf, |err| <= 1.5e-7.

    Only elementwise VPU ops (abs/where/mul/add/div/exp), so it lowers on Mosaic
    for every TPU generation; math kept in f32.
    """
    a1, a2, a3, a4, a5 = (0.254829592, -0.284496736, 1.421413741,
                          -1.453152027, 1.061405429)
    p = 0.3275911
    sgn = jnp.where(x >= 0.0, 1.0, -1.0)
    ax = jnp.abs(x)
    t = 1.0 / (1.0 + p * ax)
    poly = t * (a1 + t * (a2 + t * (a3 + t * (a4 + t * a5))))
    return sgn * (1.0 - poly * jnp.exp(-ax * ax))


def _gelu_exact_f32(x):
    # Exact (erf-based) GELU, matching F.gelu(approximate='none').
    return 0.5 * x * (1.0 + _erf_f32(x * _SQRT_HALF))


# ----------------------------- fused FFN kernel -----------------------------

def _ffn_kernel(x_ref, w1_ref, b1_ref, w2_ref, b2_ref, o_ref, acc_ref):
    # x_ref: (TM, dim); w1: (dim, TH); b1: (1, TH); w2: (TH, dim); b2: (1, dim)
    # acc_ref: (TM, dim) f32 scratch accumulating over the hidden (k) grid axis.
    k = pl.program_id(1)

    @pl.when(k == 0)
    def _():
        acc_ref[...] = jnp.zeros_like(acc_ref)

    # Linear 1 (MXU, f32 accumulation) + exact GELU in f32.
    h = jnp.dot(x_ref[...], w1_ref[...], preferred_element_type=jnp.float32)
    h = h + b1_ref[...].astype(jnp.float32)
    h = _gelu_exact_f32(h)
    # Dropout: identity at inference.  TODO(synk): training-mode dropout via pltpu PRNG.

    # Linear 2 partial product (MXU, f32 accumulation). Hidden activation stays on-chip.
    h = h.astype(w2_ref.dtype)
    acc_ref[...] += jnp.dot(h, w2_ref[...], preferred_element_type=jnp.float32)

    @pl.when(k == pl.num_programs(1) - 1)
    def _():
        y = acc_ref[...] + b2_ref[...].astype(jnp.float32)
        o_ref[...] = y.astype(o_ref.dtype)


# ----------------------------- tiling heuristics -----------------------------

def _vmem_estimate_bytes(tm, th, dim, x_bytes, w_bytes, out_bytes):
    est = 2 * tm * dim * x_bytes                      # x tile (double-buffered)
    est += 2 * tm * dim * out_bytes                   # out tile (double-buffered)
    est += 2 * (dim * th + th * dim) * w_bytes        # w1 / w2 tiles (double-buffered)
    est += 2 * (th + dim) * w_bytes                   # biases
    est += tm * dim * 4                               # f32 accumulator scratch
    est += tm * th * 4                                # in-flight f32 hidden activation
    return est


def _choose_tiles(M, dim, hidden, x_bytes, w_bytes, out_bytes,
                  budget_bytes=28 * 1024 * 1024):
    """Pick (tile_m, tile_h).  tile_h must divide hidden (reduction correctness);
    prefer tile_h == hidden (weights fetched once), then the largest tile_m.
    Budget also fits v7x's 64 MiB physical / 32 MiB default scoped VMEM."""
    th_candidates = [hidden] + [t for t in (4096, 2048, 1024, 512, 256, 128)
                                if t < hidden and hidden % t == 0]
    tm_candidates = [min(M, t) for t in (1024, 512, 256, 128)]
    for th in th_candidates:
        for tm in tm_candidates:
            if _vmem_estimate_bytes(tm, th, dim, x_bytes, w_bytes, out_bytes) <= budget_bytes:
                return tm, th
    return min(M, 128), th_candidates[-1]


# ----------------------------- public entry point -----------------------------

def feed_forward(params, x, *, tile_m=None, tile_h=None):
    """FeedForward forward pass: Linear -> GELU -> (Dropout) -> Linear -> (Dropout).

    x: (..., dim).  Works with f32 or bf16 inputs/weights; accumulation is always f32.
    """
    w1, b1, w2, b2 = params["w1"], params["b1"], params["w2"], params["b2"]
    dim, hidden = w1.shape
    orig_shape = x.shape
    M = int(math.prod(orig_shape[:-1]))
    x2 = x.reshape(M, dim)

    x_bytes = jnp.dtype(x2.dtype).itemsize
    w_bytes = jnp.dtype(w1.dtype).itemsize
    out_dtype = x2.dtype
    out_bytes = jnp.dtype(out_dtype).itemsize

    tm_auto, th_auto = _choose_tiles(M, dim, hidden, x_bytes, w_bytes, out_bytes)
    tm = min(tile_m, M) if tile_m is not None else tm_auto
    th = tile_h if tile_h is not None else th_auto
    assert hidden % th == 0, "tile_h must divide hidden_dim"

    grid = (pl.cdiv(M, tm), hidden // th)

    est = _vmem_estimate_bytes(tm, th, dim, x_bytes, w_bytes, out_bytes)
    # Explicit VMEM limit: generous headroom but always below v7x's 64 MiB physical.
    vmem_limit = int(min(40 * 1024 * 1024, max(int(1.5 * est), 16 * 1024 * 1024)))

    b1_2 = b1.reshape(1, hidden)
    b2_2 = b2.reshape(1, dim)

    out = pl.pallas_call(
        _ffn_kernel,
        out_shape=jax.ShapeDtypeStruct((M, dim), out_dtype),
        grid=grid,
        in_specs=[
            pl.BlockSpec((tm, dim), lambda i, k: (i, 0)),      # x tile (resident over k)
            pl.BlockSpec((dim, th), lambda i, k: (0, k)),      # w1 column slab
            pl.BlockSpec((1, th), lambda i, k: (0, k)),        # b1 slab
            pl.BlockSpec((th, dim), lambda i, k: (k, 0)),      # w2 row slab
            pl.BlockSpec((1, dim), lambda i, k: (0, 0)),       # b2
        ],
        out_specs=pl.BlockSpec((tm, dim), lambda i, k: (i, 0)),  # accumulated over k
        scratch_shapes=[pltpu.VMEM((tm, dim), jnp.float32)],
        compiler_params=pltpu.CompilerParams(
            dimension_semantics=("parallel", "arbitrary"),     # M tiles split across TCs
            vmem_limit_bytes=vmem_limit,
        ),
    )(x2, w1, b1_2, w2, b2_2)

    return out.reshape(orig_shape)


# ----------------------------- parameters (nn.Linear-style init) -----------------------------

def init_params(key, dim, hidden_dim, dtype=jnp.float32):
    k1, k2, k3, k4 = jax.random.split(key, 4)
    bound1 = 1.0 / math.sqrt(dim)
    bound2 = 1.0 / math.sqrt(hidden_dim)
    return {
        "w1": jax.random.uniform(k1, (dim, hidden_dim), jnp.float32, -bound1, bound1).astype(dtype),
        "b1": jax.random.uniform(k2, (hidden_dim,), jnp.float32, -bound1, bound1).astype(dtype),
        "w2": jax.random.uniform(k3, (hidden_dim, dim), jnp.float32, -bound2, bound2).astype(dtype),
        "b2": jax.random.uniform(k4, (dim,), jnp.float32, -bound2, bound2).astype(dtype),
    }


def _reference(params, x):
    # Pure-JAX reference (exact erf GELU), f32 throughout.
    h = x.astype(jnp.float32) @ params["w1"].astype(jnp.float32) + params["b1"].astype(jnp.float32)
    h = jax.nn.gelu(h, approximate=False)
    y = h @ params["w2"].astype(jnp.float32) + params["b2"].astype(jnp.float32)
    return y


# ----------------------------- demo -----------------------------

if __name__ == "__main__":
    batch, seq, dim, hidden_dim = 2, 8, 32, 64
    dropout_rate = 0.0  # inference forward: Dropout is identity

    key = jax.random.PRNGKey(0)
    kx, kp = jax.random.split(key)
    x = jax.random.normal(kx, (batch, seq, dim), jnp.float32)
    params = init_params(kp, dim, hidden_dim, dtype=jnp.float32)
    # (bf16 activations/weights are also supported: pass bf16 x / params; f32 accumulation
    #  inside the kernel is preserved via preferred_element_type.)

    fwd = jax.jit(partial(feed_forward, params))
    y = fwd(x)
    jax.block_until_ready(y)

    assert y.shape == (batch, seq, dim)
    y_ref = _reference(params, x)
    assert bool(jnp.allclose(y.astype(jnp.float32), y_ref, atol=2e-4, rtol=2e-4)), (
        "mismatch vs reference")

    print("KERNEL_OK")
</pallas_src>

<mosaic_0001>
module attributes {stable_mosaic.version = 11 : i64} {
  func.func @_ffn_kernel(%arg0: i32, %arg1: i32, %arg2: memref<16x32xf32, #tpu.memory_space<vmem>>, %arg3: memref<32x64xf32, #tpu.memory_space<vmem>>, %arg4: memref<1x64xf32, #tpu.memory_space<vmem>>, %arg5: memref<64x32xf32, #tpu.memory_space<vmem>>, %arg6: memref<1x32xf32, #tpu.memory_space<vmem>>, %arg7: memref<16x32xf32, #tpu.memory_space<vmem>>, %arg8: memref<16x32xf32, #tpu.memory_space<vmem>>) attributes {dimension_semantics = [#tpu.dimension_semantics<parallel>, #tpu.dimension_semantics<arbitrary>], iteration_bounds = array<i64: 1, 1>, scalar_prefetch = 0 : i64, scratch_operands = 1 : i64, tpu.core_type = #tpu.core_type<tc>, window_params = [{transform_indices = @transform_0, window_bounds = array<i64: 16, 32>}, {transform_indices = @transform_1, window_bounds = array<i64: 32, 64>}, {transform_indices = @transform_2, window_bounds = array<i64: 1, 64>}, {transform_indices = @transform_3, window_bounds = array<i64: 64, 32>}, {pipeline_mode = #tpu.pipeline_mode<synchronous>, transform_indices = @transform_4, window_bounds = array<i64: 1, 32>}, {transform_indices = @transform_5, window_bounds = array<i64: 16, 32>}]} {
    %c0_i32 = arith.constant 0 : i32
    %0 = arith.cmpi eq, %arg1, %c0_i32 : i32
    %1 = arith.extui %0 : i1 to i32
    %c0_i32_0 = arith.constant 0 : i32
    %2 = arith.cmpi ne, %1, %c0_i32_0 : i32
    scf.if %2 {
      %cst_31 = arith.constant 0.000000e+00 : f32
      %58 = vector.broadcast %cst_31 : f32 to vector<16x32xf32>
      %c0_32 = arith.constant 0 : index
      %c0_33 = arith.constant 0 : index
      %59 = vector.load %arg8[%c0_32, %c0_33] : memref<16x32xf32, #tpu.memory_space<vmem>>, vector<16x32xf32>
      tpu.vector_store %arg8[%c0_32, %c0_33], %58 {strides = array<i32>} : memref<16x32xf32, #tpu.memory_space<vmem>>, vector<16x32xf32>,
    } else {
    }
    %c0 = arith.constant 0 : index
    %c0_1 = arith.constant 0 : index
    %3 = vector.load %arg2[%c0, %c0_1] : memref<16x32xf32, #tpu.memory_space<vmem>>, vector<16x32xf32>
    %c0_2 = arith.constant 0 : index
    %c0_3 = arith.constant 0 : index
    %4 = vector.load %arg3[%c0_2, %c0_3] : memref<32x64xf32, #tpu.memory_space<vmem>>, vector<32x64xf32>
    %cst = arith.constant dense<0.000000e+00> : vector<16x64xf32>
    %5 = tpu.matmul %3, %4, %cst {dimension_numbers = #tpu.dot_dimension_numbers<[1], [0], [0], [1], [0, 0, 1, 1], [], []>} : vector<16x32xf32>, vector<32x64xf32>, vector<16x64xf32> -> vector<16x64xf32>
    %c0_4 = arith.constant 0 : index
    %c0_5 = arith.constant 0 : index
    %6 = vector.load %arg4[%c0_4, %c0_5] : memref<1x64xf32, #tpu.memory_space<vmem>>, vector<1x64xf32>
    %7 = vector.broadcast %6 : vector<1x64xf32> to vector<16x64xf32>
    %8 = arith.addf %5, %7 : vector<16x64xf32>
    %cst_6 = arith.constant 5.000000e-01 : f32
    %9 = vector.broadcast %cst_6 : f32 to vector<16x64xf32>
    %10 = arith.mulf %9, %8 : vector<16x64xf32>
    %cst_7 = arith.constant 0.707106769 : f32
    %11 = vector.broadcast %cst_7 : f32 to vector<16x64xf32>
    %12 = arith.mulf %8, %11 : vector<16x64xf32>
    %cst_8 = arith.constant 0.000000e+00 : f32
    %13 = vector.broadcast %cst_8 : f32 to vector<16x64xf32>
    %14 = arith.cmpf oge, %12, %13 : vector<16x64xf32>
    %cst_9 = arith.constant 1.000000e+00 : f32
    %cst_10 = arith.constant -1.000000e+00 : f32
    %15 = vector.broadcast %cst_9 : f32 to vector<16x64xf32>
    %16 = vector.broadcast %cst_10 : f32 to vector<16x64xf32>
    %17 = arith.select %14, %15, %16 : vector<16x64xi1>, vector<16x64xf32>
    %18 = math.absf %12 : vector<16x64xf32>
    %cst_11 = arith.constant 0.327591091 : f32
    %19 = vector.broadcast %cst_11 : f32 to vector<16x64xf32>
    %20 = arith.mulf %19, %18 : vector<16x64xf32>
    %cst_12 = arith.constant 1.000000e+00 : f32
    %21 = vector.broadcast %cst_12 : f32 to vector<16x64xf32>
    %22 = arith.addf %21, %20 : vector<16x64xf32>
    %cst_13 = arith.constant 1.000000e+00 : f32
    %23 = vector.broadcast %cst_13 : f32 to vector<16x64xf32>
    %24 = arith.divf %23, %22 : vector<16x64xf32>
    %cst_14 = arith.constant 1.06140542 : f32
    %25 = vector.broadcast %cst_14 : f32 to vector<16x64xf32>
    %26 = arith.mulf %24, %25 : vector<16x64xf32>
    %cst_15 = arith.constant -1.45315206 : f32
    %27 = vector.broadcast %cst_15 : f32 to vector<16x64xf32>
    %28 = arith.addf %27, %26 : vector<16x64xf32>
    %29 = arith.mulf %24, %28 : vector<16x64xf32>
    %cst_16 = arith.constant 1.42141378 : f32
    %30 = vector.broadcast %cst_16 : f32 to vector<16x64xf32>
    %31 = arith.addf %30, %29 : vector<16x64xf32>
    %32 = arith.mulf %24, %31 : vector<16x64xf32>
    %cst_17 = arith.constant -0.284496725 : f32
    %33 = vector.broadcast %cst_17 : f32 to vector<16x64xf32>
    %34 = arith.addf %33, %32 : vector<16x64xf32>
    %35 = arith.mulf %24, %34 : vector<16x64xf32>
    %cst_18 = arith.constant 0.254829586 : f32
    %36 = vector.broadcast %cst_18 : f32 to vector<16x64xf32>
    %37 = arith.addf %36, %35 : vector<16x64xf32>
    %38 = arith.mulf %24, %37 : vector<16x64xf32>
    %cst_19 = arith.constant 0.000000e+00 : f32
    %39 = vector.broadcast %cst_19 : f32 to vector<16x64xf32>
    %40 = arith.subf %39, %18 : vector<16x64xf32>
    %41 = arith.mulf %40, %18 : vector<16x64xf32>
    %42 = math.exp %41 : vector<16x64xf32>
    %43 = arith.mulf %38, %42 : vector<16x64xf32>
    %cst_20 = arith.constant 1.000000e+00 : f32
    %44 = vector.broadcast %cst_20 : f32 to vector<16x64xf32>
    %45 = arith.subf %44, %43 : vector<16x64xf32>
    %46 = arith.mulf %17, %45 : vector<16x64xf32>
    %cst_21 = arith.constant 1.000000e+00 : f32
    %47 = vector.broadcast %cst_21 : f32 to vector<16x64xf32>
    %48 = arith.addf %47, %46 : vector<16x64xf32>
    %49 = arith.mulf %10, %48 : vector<16x64xf32>
    %c0_22 = arith.constant 0 : index
    %c0_23 = arith.constant 0 : index
    %50 = vector.load %arg8[%c0_22, %c0_23] : memref<16x32xf32, #tpu.memory_space<vmem>>, vector<16x32xf32>
    %c0_24 = arith.constant 0 : index
    %c0_25 = arith.constant 0 : index
    %51 = vector.load %arg5[%c0_24, %c0_25] : memref<64x32xf32, #tpu.memory_space<vmem>>, vector<64x32xf32>
    %cst_26 = arith.constant dense<0.000000e+00> : vector<16x32xf32>
    %52 = tpu.matmul %49, %51, %cst_26 {dimension_numbers = #tpu.dot_dimension_numbers<[1], [0], [0], [1], [0, 0, 1, 1], [], []>} : vector<16x64xf32>, vector<64x32xf32>, vector<16x32xf32> -> vector<16x32xf32>
    %53 = arith.addf %50, %52 : vector<16x32xf32>
    %c0_27 = arith.constant 0 : index
    %c0_28 = arith.constant 0 : index
    %54 = vector.load %arg8[%c0_27, %c0_28] : memref<16x32xf32, #tpu.memory_space<vmem>>, vector<16x32xf32>
    tpu.vector_store %arg8[%c0_27, %c0_28], %53 {strides = array<i32>} : memref<16x32xf32, #tpu.memory_space<vmem>>, vector<16x32xf32>,
    %c0_i32_29 = arith.constant 0 : i32
    %55 = arith.cmpi eq, %arg1, %c0_i32_29 : i32
    %56 = arith.extui %55 : i1 to i32
    %c0_i32_30 = arith.constant 0 : i32
    %57 = arith.cmpi ne, %56, %c0_i32_30 : i32
    scf.if %57 {
      %c0_31 = arith.constant 0 : index
      %c0_32 = arith.constant 0 : index
      %58 = vector.load %arg8[%c0_31, %c0_32] : memref<16x32xf32, #tpu.memory_space<vmem>>, vector<16x32xf32>
      %c0_33 = arith.constant 0 : index
      %c0_34 = arith.constant 0 : index
      %59 = vector.load %arg6[%c0_33, %c0_34] : memref<1x32xf32, #tpu.memory_space<vmem>>, vector<1x32xf32>
      %60 = vector.broadcast %59 : vector<1x32xf32> to vector<16x32xf32>
      %61 = arith.addf %58, %60 : vector<16x32xf32>
      %c0_35 = arith.constant 0 : index
      %c0_36 = arith.constant 0 : index
      %62 = vector.load %arg7[%c0_35, %c0_36] : memref<16x32xf32, #tpu.memory_space<vmem>>, vector<16x32xf32>
      tpu.vector_store %arg7[%c0_35, %c0_36], %61 {strides = array<i32>} : memref<16x32xf32, #tpu.memory_space<vmem>>, vector<16x32xf32>,
    } else {
    }
    return
  }
  func.func @transform_0(%arg0: i32, %arg1: i32) -> (i32, i32) {
    %c0_i32 = arith.constant 0 : i32
    %c0_i32_0 = arith.constant 0 : i32
    return %arg0, %c0_i32 : i32, i32
  }
  func.func @transform_1(%arg0: i32, %arg1: i32) -> (i32, i32) {
    %c0_i32 = arith.constant 0 : i32
    %c0_i32_0 = arith.constant 0 : i32
    return %c0_i32, %arg1 : i32, i32
  }
  func.func @transform_2(%arg0: i32, %arg1: i32) -> (i32, i32) {
    %c0_i32 = arith.constant 0 : i32
    %c0_i32_0 = arith.constant 0 : i32
    return %c0_i32, %arg1 : i32, i32
  }
  func.func @transform_3(%arg0: i32, %arg1: i32) -> (i32, i32) {
    %c0_i32 = arith.constant 0 : i32
    %c0_i32_0 = arith.constant 0 : i32
    return %arg1, %c0_i32 : i32, i32
  }
  func.func @transform_4(%arg0: i32, %arg1: i32) -> (i32, i32) {
    %c0_i32 = arith.constant 0 : i32
    %c0_i32_0 = arith.constant 0 : i32
    %c0_i32_1 = arith.constant 0 : i32
    return %c0_i32, %c0_i32_0 : i32, i32
  }
  func.func @transform_5(%arg0: i32, %arg1: i32) -> (i32, i32) {
    %c0_i32 = arith.constant 0 : i32
    %c0_i32_0 = arith.constant 0 : i32
    return %arg0, %c0_i32 : i32, i32
  }
}

</mosaic_0001>

<llo_original>
// kernel: feed_forward.1
$region0: #{feed_forward.1}
  #allocation0 [shape = 'u32[]', space=smem, size = 0x4, offset = 0x4, fixed_abs, tag = 'smem constant byte address 0x4 - core index']
  #allocation1 [shape = 'u32[144,128]{1,0:T(1,128)}', space=vmem, size = 0x12000, scoped, tag = 'internal scratch']
  #allocation2 [shape = 'f32[16,32]{1,0:T(8,128)}', space=vmem, size = 0x2000, scoped, tag = 'scratch operand']
  %s0 = inlined_call_operand.hbm [shape: f32[16,32], index: 0, kind: input, shape index: {}]
  %s1 = inlined_call_operand.hbm [shape: f32[32,64], index: 1, kind: input, shape index: {}]
  %s2 = inlined_call_operand.vmem [shape: f32[1,64], index: 2, kind: input, shape index: {}]
  %s3 = inlined_call_operand.hbm [shape: f32[64,32], index: 3, kind: input, shape index: {}]
  %s4 = inlined_call_operand.vmem [shape: f32[1,32], index: 4, kind: input, shape index: {}]
  %s5 = inlined_call_operand.hbm [shape: f32[16,32], index: 5, kind: output, shape index: {}]
  %s6 = sld [smem:[#allocation0]]
  $region50: #{feed_forward.1} parent=0
    _
  %s8 = ssub.s32 1, %s6
  %s9 = scalar_select 0, %s8, %s6
  $region1: #{feed_forward.1} parent=0
    #allocation3 [shape = 'u8[8192]{0}', space=vmem, size = 0x2000, scoped, tag = 'input window, operand 0, single buffered']
    #allocation4 [shape = 's32[1]{0}', space=sflag, size = 0x4, scoped, tag = 'scoped memory for feed_forward.1']
    #allocation5 [shape = 's32[1]{0}', space=sflag, size = 0x4, scoped, tag = 'scoped memory for feed_forward.1']
    #allocation6 [shape = 'u8[16384]{0}', space=vmem, size = 0x4000, scoped, tag = 'input window, operand 1, single buffered']
    #allocation7 [shape = 's32[1]{0}', space=sflag, size = 0x4, scoped, tag = 'scoped memory for feed_forward.1']
    #allocation8 [shape = 'u8[32768]{0}', space=vmem, size = 0x8000, scoped, tag = 'input window, operand 3, single buffered']
    #allocation9 [shape = 'u8[8192]{0}', space=vmem, size = 0x2000, scoped, tag = 'output window, operand 0, single buffered']
    %10 = vsyncpa [#allocation4], 0
    %11 = vsyncpa [#allocation7], 0
    %12 = vsyncpa [#allocation5], 0
    // Predicated region
    $region2: #{feed_forward.1} parent=1 // pred_check
      _
    $region3: #{feed_forward.1} parent=1 // pred_check_branch
      %14 = sbr.rel (0) target = $region5
    $region4: #{feed_forward.1} parent=1 // pred_region
      %s16 = ssub.s32 256, 256
      %17 = vsyncadd [#allocation4], %s16
      %s18 = sshll.u32 [#allocation3], 4
      %s19 = int_to_ptr.vmem [resolvable:$true] %s18
      %24 = dma.hbm_to_vmem [thread:$0]  %s0, 256, %s19, [#allocation4], 128, 128, 8
    $region5: #{feed_forward.1} parent=1 // pred_fallthru
      _
    // Predicated region
    $region6: #{feed_forward.1} parent=1 // pred_check
      _
    $region7: #{feed_forward.1} parent=1 // pred_check_branch
      %26 = sbr.rel (0) target = $region9
    $region8: #{feed_forward.1} parent=1 // pred_region
      %s28 = ssub.s32 512, 512
      %29 = vsyncadd [#allocation7], %s28
      %s30 = sshll.u32 [#allocation6], 4
      %s31 = int_to_ptr.vmem [resolvable:$true] %s30
      %36 = dma.hbm_to_vmem [thread:$0]  %s1, 512, %s31, [#allocation7], 128, 128, 8
    $region9: #{feed_forward.1} parent=1 // pred_fallthru
      _
    // Predicated region
    $region10: #{feed_forward.1} parent=1 // pred_check
      _
    $region11: #{feed_forward.1} parent=1 // pred_check_branch
      %38 = sbr.rel (0) target = $region13
    $region12: #{feed_forward.1} parent=1 // pred_region
      _
    $region13: #{feed_forward.1} parent=1 // pred_fallthru
      _
    // Predicated region
    $region14: #{feed_forward.1} parent=1 // pred_check
      _
    $region15: #{feed_forward.1} parent=1 // pred_check_branch
      %40 = sbr.rel (0) target = $region17
    $region16: #{feed_forward.1} parent=1 // pred_region
      %s42 = ssub.s32 1024, 1024
      %43 = vsyncadd [#allocation7], %s42
      %s44 = sshll.u32 [#allocation8], 4
      %s45 = int_to_ptr.vmem [resolvable:$true] %s44
      %50 = dma.hbm_to_vmem [thread:$0]  %s3, 1024, %s45, [#allocation7], 128, 128, 8
    $region17: #{feed_forward.1} parent=1 // pred_fallthru
      _
    // Predicated region
    $region18: #{feed_forward.1} parent=1 // pred_check
      _
    $region19: #{feed_forward.1} parent=1 // pred_check_branch
      %52 = sbr.rel (0) target = $region21
    $region20: #{feed_forward.1} parent=1 // pred_region
      _
    $region21: #{feed_forward.1} parent=1 // pred_fallthru
      _
    // Predicated region
    $region22: #{feed_forward.1} parent=1 // pred_check
      _
    $region23: #{feed_forward.1} parent=1 // pred_check_branch
      %54 = sbr.rel (0) target = $region25
    $region24: #{feed_forward.1} parent=1 // pred_region
      %55 = dma.done [#allocation4], 256
    $region25: #{feed_forward.1} parent=1 // pred_fallthru
      _
    // Predicated region
    $region26: #{feed_forward.1} parent=1 // pred_check
      _
    $region27: #{feed_forward.1} parent=1 // pred_check_branch
      %57 = sbr.rel (0) target = $region29
    $region28: #{feed_forward.1} parent=1 // pred_region
      %58 = dma.done [#allocation7], 512
    $region29: #{feed_forward.1} parent=1 // pred_fallthru
      _
    // Predicated region
    $region30: #{feed_forward.1} parent=1 // pred_check
      _
    $region31: #{feed_forward.1} parent=1 // pred_check_branch
      %60 = sbr.rel (0) target = $region33
    $region32: #{feed_forward.1} parent=1 // pred_region
      %61 = dma.done [#allocation7], 1024
    $region33: #{feed_forward.1} parent=1 // pred_fallthru
      _
    %p62 = scmp.eq.s32.totalorder 0, 0
    // Predicated region
    $region34: #{feed_forward.1} parent=1 // pred_check
      %p63 = pneg %p62
    $region35: #{feed_forward.1} parent=1 // pred_check_branch
      %65 = sbr.rel (%p63) target = $region37
    $region36: #{feed_forward.1} parent=1 // pred_region
      %vm66 = vcmask 261120
      %67 = vst.msk [vmem:[#allocation2] sm:$0xff] %vm66, 0.0
      %68 = vst.msk [vmem:[#allocation2 + $0x8] sm:$0xff] %vm66, 0.0
    $region37: #{feed_forward.1} parent=1 // pred_fallthru
      _
    %v69 = vld [vmem:[#allocation3] sm:$0xff]
    %v70 = vld [vmem:[#allocation3 + $0x8] sm:$0xff]
    %v71 = vld [vmem:[#allocation6] sm:$0xff]
    %v72 = vld [vmem:[#allocation6 + $0x8] sm:$0xff]
    %v73 = vld [vmem:[#allocation6 + $0x10] sm:$0xff]
    %v74 = vld [vmem:[#allocation6 + $0x18] sm:$0xff]
    %v75 = vld [vmem:[%s2] sm:$0x1]
    %v77 = vlaneseq
    %v78 = vshrl.u32 %v77, 7
    %v79 = vsub.s32 0, %v78
    %v80 = vrot.slane %v75, %v79
    %vm82 = vcmask 261120
    %v84 = vsel %vm82, %v69, 0
    %v87 = vsel %vm82, %v70, 0
    %89 = vmatprep.subr.mxu0 0.0
    %90 = vmatpush1.msra.mxu0 %v71
    %91 = vmatprep.subr.mxu0 0.0
    %92 = vmatpush1.msra.mxu0 %v72
    %93 = vmatprep.subr.mxu0 0.0
    %94 = vmatpush1.msra.mxu0 %v73
    %95 = vmatprep.subr.mxu0 0.0
    %96 = vmatpush1.msra.mxu0 %v74
    %97 = vmatprep.subr.mxu0 0.0
    %98 = vmatpush1.msra.mxu0 0.0
    %99 = vmatprep.subr.mxu0 0.0
    %100 = vmatpush1.msra.mxu0 0.0
    %101 = vmatprep.subr.mxu0 0.0
    %102 = vmatpush1.msra.mxu0 0.0
    %103 = vmatprep.subr.mxu0 0.0
    %104 = vmatpush1.msra.mxu0 0.0
    %105 = vmatprep.subr.mxu0 0.0
    %106 = vmatpush1.msra.mxu0 0.0
    %107 = vmatprep.subr.mxu0 0.0
    %108 = vmatpush1.msra.mxu0 0.0
    %109 = vmatprep.subr.mxu0 0.0
    %110 = vmatpush1.msra.mxu0 0.0
    %111 = vmatprep.subr.mxu0 0.0
    %112 = vmatpush1.msra.mxu0 0.0
    %113 = vmatprep.subr.mxu0 0.0
    %114 = vmatpush1.msra.mxu0 0.0
    %115 = vmatprep.subr.mxu0 0.0
    %116 = vmatpush1.msra.mxu0 0.0
    %117 = vmatprep.subr.mxu0 0.0
    %118 = vmatpush1.msra.mxu0 0.0
    %119 = vmatprep.subr.mxu0 0.0
    %120 = vmatpush1.msra.mxu0 0.0
    %121 = vmatprep.subr.mxu0 0.0
    %122 = vmatpush1.msra.mxu0 0.0
    %123 = vmatprep.subr.mxu0 0.0
    %124 = vmatpush1.msra.mxu0 0.0
    %125 = vmatprep.subr.mxu0 0.0
    %126 = vmatpush1.msra.mxu0 0.0
    %127 = vmatprep.subr.mxu0 0.0
    %128 = vmatpush1.msra.mxu0 0.0
    %129 = vmatprep.subr.mxu0 0.0
    %130 = vmatpush1.msra.mxu0 0.0
    %131 = vmatprep.subr.mxu0 0.0
    %132 = vmatpush1.msra.mxu0 0.0
    %133 = vmatprep.subr.mxu0 0.0
    %134 = vmatpush1.msra.mxu0 0.0
    %135 = vmatprep.subr.mxu0 0.0
    %136 = vmatpush1.msra.mxu0 0.0
    %137 = vmatprep.subr.mxu0 0.0
    %138 = vmatpush1.msra.mxu0 0.0
    %139 = vmatprep.subr.mxu0 0.0
    %140 = vmatpush1.msra.mxu0 0.0
    %141 = vmatprep.subr.mxu0 0.0
    %142 = vmatpush1.msra.mxu0 0.0
    %143 = vmatprep.subr.mxu0 0.0
    %144 = vmatpush1.msra.mxu0 0.0
    %145 = vmatprep.subr.mxu0 0.0
    %146 = vmatpush1.msra.mxu0 0.0
    %147 = vmatprep.subr.mxu0 0.0
    %148 = vmatpush1.msra.mxu0 0.0
    %149 = vmatprep.subr.mxu0 0.0
    %150 = vmatpush1.msra.mxu0 0.0
    %151 = vmatprep.subr.mxu0 0.0
    %152 = vmatpush1.msra.mxu0 0.0
    %153 = vmatprep.mubr.f32.mxu0 0.0
    %154 = vmatmul.mubr.f32.gmra.mrb[0].mxu0 %v84
    %v155 = vpop.f32.mrb[0].mxu0
    %v156 = vadd.f32 %v80, %v155
    %v157 = vpop.f32.mrb[0].mxu0
    %158 = vmatprep.mubr.f32.mxu0 0.0
    %159 = vmatmul.mubr.f32.gmra.mrb[0].mxu0 %v87
    %v160 = vpop.f32.mrb[0].mxu0
    %v161 = vadd.f32 %v80, %v160
    %v162 = vpop.f32.mrb[0].mxu0
    %163 = vdwg.mxu0
    %v164 = vmul.f32 %v156, 0.5
    %v165 = vmul.f32 %v161, 0.5
    %v166 = vmul.f32 %v156, 0.70710677
    %v167 = vmul.f32 %v161, 0.70710677
    %vm168 = vcmp.ge.f32.partialorder %v166, 0.0
    %vm169 = vcmp.ge.f32.partialorder %v167, 0.0
    %v170 = vsel %vm168, 1.0, -1.0
    %v171 = vsel %vm169, 1.0, -1.0
    %v172 = vand.u32 2147483647, %v166
    %v173 = vand.u32 2147483647, %v167
    %v174 = vmul.f32 %v172, 0.3275911
    %v175 = vmul.f32 %v173, 0.3275911
    %v176 = vadd.f32 %v174, 1.0
    %v177 = vadd.f32 %v175, 1.0
    %v178 = vrcp.pop %v176
    %v179 = vmul.f32 1.0, %v178
    %v180 = vrcp.pop %v177
    %v181 = vmul.f32 1.0, %v180
    %v182 = vmul.f32 %v179, 1.0614054
    %v183 = vmul.f32 %v181, 1.0614054
    %v184 = vadd.f32 %v182, -1.4531521
    %v185 = vadd.f32 %v183, -1.4531521
    %v186 = vmul.f32 %v179, %v184
    %v187 = vmul.f32 %v181, %v185
    %v188 = vadd.f32 %v186, 1.4214138
    %v189 = vadd.f32 %v187, 1.4214138
    %v190 = vmul.f32 %v179, %v188
    %v191 = vmul.f32 %v181, %v189
    %v192 = vadd.f32 %v190, -0.28449672
    %v193 = vadd.f32 %v191, -0.28449672
    %v194 = vmul.f32 %v179, %v192
    %v195 = vmul.f32 %v181, %v193
    %v196 = vadd.f32 %v194, 0.2548296
    %v197 = vadd.f32 %v195, 0.2548296
    %v198 = vmul.f32 %v179, %v196
    %v199 = vmul.f32 %v181, %v197
    %v200 = vsub.f32 0.0, %v172
    %v201 = vsub.f32 0.0, %v173
    %v202 = vmul.f32 %v200, %v172
    %v203 = vmul.f32 %v201, %v173
    %v204 = vmul.f32 %v202, 1.442695
    %v205 = vpow.pop %v204
    %v206 = vmul.f32 %v203, 1.442695
    %v207 = vpow.pop %v206
    %v208 = vmul.f32 %v198, %v205
    %v209 = vmul.f32 %v199, %v207
    %v210 = vsub.f32 1.0, %v208
    %v211 = vsub.f32 1.0, %v209
    %v212 = vmul.f32 %v170, %v210
    %v213 = vmul.f32 %v171, %v211
    %v214 = vadd.f32 %v212, 1.0
    %v215 = vadd.f32 %v213, 1.0
    %v216 = vmul.f32 %v164, %v214
    %v217 = vmul.f32 %v165, %v215
    %v218 = vld [vmem:[#allocation2] sm:$0xff]
    %v219 = vld [vmem:[#allocation2 + $0x8] sm:$0xff]
    %v220 = vld [vmem:[#allocation8] sm:$0xff]
    %v221 = vld [vmem:[#allocation8 + $0x8] sm:$0xff]
    %v222 = vld [vmem:[#allocation8 + $0x10] sm:$0xff]
    %v223 = vld [vmem:[#allocation8 + $0x18] sm:$0xff]
    %v224 = vld [vmem:[#allocation8 + $0x20] sm:$0xff]
    %v225 = vld [vmem:[#allocation8 + $0x28] sm:$0xff]
    %v226 = vld [vmem:[#allocation8 + $0x30] sm:$0xff]
    %v227 = vld [vmem:[#allocation8 + $0x38] sm:$0xff]
    %vm228 = vcmask 523264
    %v230 = vsel %vm228, %v216, 0
    %v233 = vsel %vm228, %v217, 0
    %235 = vmatprep.subr.mxu0 0.0
    %236 = vmatpush1.msra.mxu0 %v220
    %237 = vmatprep.subr.mxu0 0.0
    %238 = vmatpush1.msra.mxu0 %v221
    %239 = vmatprep.subr.mxu0 0.0
    %240 = vmatpush1.msra.mxu0 %v222
    %241 = vmatprep.subr.mxu0 0.0
    %242 = vmatpush1.msra.mxu0 %v223
    %243 = vmatprep.subr.mxu0 0.0
    %244 = vmatpush1.msra.mxu0 %v224
    %245 = vmatprep.subr.mxu0 0.0
    %246 = vmatpush1.msra.mxu0 %v225
    %247 = vmatprep.subr.mxu0 0.0
    %248 = vmatpush1.msra.mxu0 %v226
    %249 = vmatprep.subr.mxu0 0.0
    %250 = vmatpush1.msra.mxu0 %v227
    %251 = vmatprep.subr.mxu0 0.0
    %252 = vmatpush1.msra.mxu0 0.0
    %253 = vmatprep.subr.mxu0 0.0
    %254 = vmatpush1.msra.mxu0 0.0
    %255 = vmatprep.subr.mxu0 0.0
    %256 = vmatpush1.msra.mxu0 0.0
    %257 = vmatprep.subr.mxu0 0.0
    %258 = vmatpush1.msra.mxu0 0.0
    %259 = vmatprep.subr.mxu0 0.0
    %260 = vmatpush1.msra.mxu0 0.0
    %261 = vmatprep.subr.mxu0 0.0
    %262 = vmatpush1.msra.mxu0 0.0
    %263 = vmatprep.subr.mxu0 0.0
    %264 = vmatpush1.msra.mxu0 0.0
    %265 = vmatprep.subr.mxu0 0.0
    %266 = vmatpush1.msra.mxu0 0.0
    %267 = vmatprep.subr.mxu0 0.0
    %268 = vmatpush1.msra.mxu0 0.0
    %269 = vmatprep.subr.mxu0 0.0
    %270 = vmatpush1.msra.mxu0 0.0
    %271 = vmatprep.subr.mxu0 0.0
    %272 = vmatpush1.msra.mxu0 0.0
    %273 = vmatprep.subr.mxu0 0.0
    %274 = vmatpush1.msra.mxu0 0.0
    %275 = vmatprep.subr.mxu0 0.0
    %276 = vmatpush1.msra.mxu0 0.0
    %277 = vmatprep.subr.mxu0 0.0
    %278 = vmatpush1.msra.mxu0 0.0
    %279 = vmatprep.subr.mxu0 0.0
    %280 = vmatpush1.msra.mxu0 0.0
    %281 = vmatprep.subr.mxu0 0.0
    %282 = vmatpush1.msra.mxu0 0.0
    %283 = vmatprep.subr.mxu0 0.0
    %284 = vmatpush1.msra.mxu0 0.0
    %285 = vmatprep.subr.mxu0 0.0
    %286 = vmatpush1.msra.mxu0 0.0
    %287 = vmatprep.subr.mxu0 0.0
    %288 = vmatpush1.msra.mxu0 0.0
    %289 = vmatprep.subr.mxu0 0.0
    %290 = vmatpush1.msra.mxu0 0.0
    %291 = vmatprep.subr.mxu0 0.0
    %292 = vmatpush1.msra.mxu0 0.0
    %293 = vmatprep.subr.mxu0 0.0
    %294 = vmatpush1.msra.mxu0 0.0
    %295 = vmatprep.subr.mxu0 0.0
    %296 = vmatpush1.msra.mxu0 0.0
    %297 = vmatprep.subr.mxu0 0.0
    %298 = vmatpush1.msra.mxu0 0.0
    %299 = vmatprep.mubr.f32.mxu0 0.0
    %300 = vmatmul.mubr.f32.gmra.mrb[0].mxu0 %v230
    %v301 = vpop.f32.mrb[0].mxu0
    %v302 = vadd.f32 0.0, %v301
    %v303 = vpop.f32.mrb[0].mxu0
    %304 = vmatprep.mubr.f32.mxu0 0.0
    %305 = vmatmul.mubr.f32.gmra.mrb[0].mxu0 %v233
    %v306 = vpop.f32.mrb[0].mxu0
    %v307 = vadd.f32 0.0, %v306
    %v308 = vpop.f32.mrb[0].mxu0
    %309 = vdwg.mxu0
    %v310 = vadd.f32 %v218, %v302
    %v311 = vadd.f32 %v219, %v307
    %312 = vst.msk [vmem:[#allocation2] sm:$0xff] %vm82, %v310
    %313 = vst.msk [vmem:[#allocation2 + $0x8] sm:$0xff] %vm82, %v311
    // Predicated region
    $region38: #{feed_forward.1} parent=1 // pred_check
      %p314 = pneg %p62
    $region39: #{feed_forward.1} parent=1 // pred_check_branch
      %316 = sbr.rel (%p314) target = $region41
    $region40: #{feed_forward.1} parent=1 // pred_region
      %v317 = vld [vmem:[#allocation2] sm:$0xff]
      %v318 = vld [vmem:[#allocation2 + $0x8] sm:$0xff]
      %v319 = vld [vmem:[%s4] sm:$0x1]
      %v321 = vlaneseq
      %v322 = vshrl.u32 %v321, 7
      %v323 = vsub.s32 0, %v322
      %v324 = vrot.slane %v319, %v323
      %v326 = vadd.f32 %v317, %v324
      %v327 = vadd.f32 %v318, %v324
      %328 = vst.msk [vmem:[#allocation9] sm:$0xff] %vm82, %v326
      %329 = vst.msk [vmem:[#allocation9 + $0x8] sm:$0xff] %vm82, %v327
    $region41: #{feed_forward.1} parent=1 // pred_fallthru
      _
    // Predicated region
    $region42: #{feed_forward.1} parent=1 // pred_check
      _
    $region43: #{feed_forward.1} parent=1 // pred_check_branch
      %331 = sbr.rel (0) target = $region45
    $region44: #{feed_forward.1} parent=1 // pred_region
      %s333 = ssub.s32 256, 256
      %334 = vsyncadd [#allocation5], %s333
      %s335 = sshll.u32 [#allocation9], 4
      %s336 = int_to_ptr.vmem [resolvable:$true] %s335
      %341 = dma.vmem_to_hbm [thread:$0]  %s336, 256, %s5, [#allocation5], 128, 128, 8
    $region45: #{feed_forward.1} parent=1 // pred_fallthru
      _
    // Predicated region
    $region46: #{feed_forward.1} parent=1 // pred_check
      _
    $region47: #{feed_forward.1} parent=1 // pred_check_branch
      %343 = sbr.rel (0) target = $region49
    $region48: #{feed_forward.1} parent=1 // pred_region
      %344 = dma.done [#allocation5], 256
    $region49: #{feed_forward.1} parent=1 // pred_fallthru
      _
    %345 = vsyncpa [#allocation4], 1
    %346 = vsyncpa [#allocation7], 1
    %347 = vsyncpa [#allocation5], 1

</llo_original>
